<compile_context>
chip_gen: v7x
topology: tpu7x:2x2x1
jax: 0.10.0
libtpu: 0.0.40
codegen_flags: <defaults>
</compile_context>

<pallas_src>
import functools

import jax
import jax.numpy as jnp
from jax.experimental import pallas as pl
from jax.experimental.pallas import tpu as pltpu


def _round_up(n: int, m: int) -> int:
    return ((n + m - 1) // m) * m


def _mlp_kernel(x_ref, mask_ref, w1_ref, b1_ref, w2_ref, b2_ref, o_ref):
    # ---- layer_input: (TB, Din) @ (Din, Dh) + (1, Dh); bf16 in, f32 acc ----
    h = jnp.dot(x_ref[...], w1_ref[...], preferred_element_type=jnp.float32)
    h = h + b1_ref[...]

    # ---- dropout: pre-scaled mask in {0, 1/(1-p)} -> one VPU multiply ----
    h = h * mask_ref[...]

    # ---- ReLU ----
    h = jnp.maximum(h, 0.0)

    # ---- layer_hidden: (TB, Dh) @ (Dh, Dout) + (1, Dout) ----
    logits = jnp.dot(h.astype(w2_ref.dtype), w2_ref[...],
                     preferred_element_type=jnp.float32)
    logits = logits + b2_ref[...]          # padded classes carry a -1e30 bias

    # ---- softmax over dim=1 (numerically stable, all f32) ----
    m = jnp.max(logits, axis=-1, keepdims=True)
    e = jnp.exp(logits - m)
    denom = jnp.sum(e, axis=-1, keepdims=True)
    # (exact divide; denom is only (TB, 1) so an EUP approx reciprocal would be
    #  in the noise and exactness keeps row sums == 1)
    o_ref[...] = (e / denom).astype(o_ref.dtype)


@functools.partial(jax.jit, static_argnames=("training", "drop_p"))
def mlp_forward(x_nchw, params, *, dropout_key=None, training=True, drop_p=0.5):
    """Fused MLP forward.  x_nchw: (B, C, H, W);  returns (B, dim_out) softmax."""
    B = x_nchw.shape[0]
    din = int(x_nchw.shape[1] * x_nchw.shape[2] * x_nchw.shape[3])
    x2d = x_nchw.reshape(B, din)           # same as torch .view(-1, C*H*W)

    w1, b1, w2, b2 = params["w1"], params["b1"], params["w2"], params["b2"]
    dh, dout = w1.shape[1], w2.shape[1]

    # ---- padded / tiled geometry ----
    lane = 128
    din_p = _round_up(din, lane)
    dh_p = _round_up(dh, lane)
    dout_p = _round_up(dout, lane)
    tb = 256 if B >= 256 else _round_up(B, 8)   # batch tile (sublane aligned)
    b_p = _round_up(B, tb)
    grid = (b_p // tb,)

    # ---- pad + cast operands (zero padding is a mathematical no-op) ----
    x_p = jnp.zeros((b_p, din_p), jnp.bfloat16).at[:B, :din].set(
        x2d.astype(jnp.bfloat16))
    w1_p = jnp.zeros((din_p, dh_p), jnp.bfloat16).at[:din, :dh].set(
        w1.astype(jnp.bfloat16))
    w2_p = jnp.zeros((dh_p, dout_p), jnp.bfloat16).at[:dh, :dout].set(
        w2.astype(jnp.bfloat16))
    b1_p = jnp.zeros((1, dh_p), jnp.float32).at[0, :dh].set(b1)
    # padded output classes get a huge negative bias -> softmax assigns them ~0
    b2_p = jnp.full((1, dout_p), -1e30, jnp.float32).at[0, :dout].set(b2)

    # ---- dropout mask, pre-scaled to {0, 1/(1-p)} ----
    if training and drop_p > 0.0:
        keep = jax.random.bernoulli(dropout_key, 1.0 - drop_p, (b_p, dh_p))
        mask = keep.astype(jnp.float32) * (1.0 / (1.0 - drop_p))
    else:
        mask = jnp.ones((b_p, dh_p), jnp.float32)

    flops = 2 * b_p * (din_p * dh_p + dh_p * dout_p)
    bytes_accessed = (x_p.size * 2 + w1_p.size * 2 + w2_p.size * 2
                      + mask.size * 4 + (dh_p + dout_p) * 4 + b_p * dout_p * 4)
    cost = pl.CostEstimate(flops=flops, transcendentals=b_p * dout_p,
                           bytes_accessed=bytes_accessed)

    out = pl.pallas_call(
        _mlp_kernel,
        out_shape=jax.ShapeDtypeStruct((b_p, dout_p), jnp.float32),
        grid=grid,
        in_specs=[
            pl.BlockSpec((tb, din_p), lambda i: (i, 0)),     # x tile (pipelined)
            pl.BlockSpec((tb, dh_p), lambda i: (i, 0)),      # dropout mask tile
            pl.BlockSpec((din_p, dh_p), lambda i: (0, 0)),   # w1 (VMEM resident)
            pl.BlockSpec((1, dh_p), lambda i: (0, 0)),       # b1 (resident)
            pl.BlockSpec((dh_p, dout_p), lambda i: (0, 0)),  # w2 (resident)
            pl.BlockSpec((1, dout_p), lambda i: (0, 0)),     # b2 (resident)
        ],
        out_specs=pl.BlockSpec((tb, dout_p), lambda i: (i, 0)),
        compiler_params=pltpu.CompilerParams(
            dimension_semantics=("parallel",)),
        cost_estimate=cost,
    )(x_p, mask, w1_p, b1_p, w2_p, b2_p)

    return out[:B, :dout]


def init_mlp_params(key, dim_in, dim_hidden, dim_out):
    """Deterministic init matching nn.Linear's U(-1/sqrt(fan_in), 1/sqrt(fan_in))."""
    k1, k2, k3, k4 = jax.random.split(key, 4)
    bound1 = 1.0 / float(dim_in) ** 0.5
    bound2 = 1.0 / float(dim_hidden) ** 0.5
    return {
        "w1": jax.random.uniform(k1, (dim_in, dim_hidden), jnp.float32,
                                 -bound1, bound1),
        "b1": jax.random.uniform(k2, (dim_hidden,), jnp.float32,
                                 -bound1, bound1),
        "w2": jax.random.uniform(k3, (dim_hidden, dim_out), jnp.float32,
                                 -bound2, bound2),
        "b2": jax.random.uniform(k4, (dim_out,), jnp.float32,
                                 -bound2, bound2),
    }


if __name__ == "__main__":
    # Small shapes consistent with the forward: NCHW input flattened to C*H*W.
    B, C, H, W = 2, 4, 16, 16
    dim_in = C * H * W          # 1024
    dim_hidden = 32
    dim_out = 10

    key = jax.random.PRNGKey(0)
    kx, kp, kd = jax.random.split(key, 3)
    x = jax.random.normal(kx, (B, C, H, W), dtype=jnp.float32)
    params = init_mlp_params(kp, dim_in, dim_hidden, dim_out)

    # nn.Module defaults to training mode -> dropout active.
    out_train = mlp_forward(x, params, dropout_key=kd, training=True, drop_p=0.5)
    out_train = jax.block_until_ready(out_train)

    # eval mode is deterministic: check against a pure-JAX f32 reference.
    out_eval = mlp_forward(x, params, training=False)
    out_eval = jax.block_until_ready(out_eval)

    x2d = x.reshape(B, dim_in)
    logits_ref = (jnp.maximum(x2d @ params["w1"] + params["b1"], 0.0)
                  @ params["w2"] + params["b2"])
    ref_eval = jax.nn.softmax(logits_ref, axis=1)

    assert out_train.shape == (B, dim_out)
    assert out_eval.shape == (B, dim_out)
    # softmax rows must sum to 1
    assert jnp.allclose(jnp.sum(out_train, axis=1), 1.0, atol=1e-5)
    assert jnp.allclose(jnp.sum(out_eval, axis=1), 1.0, atol=1e-5)
    # bf16-matmul tolerance vs f32 reference
    assert jnp.allclose(out_eval, ref_eval, atol=2e-2)
    print("KERNEL_OK")
</pallas_src>

<mosaic_0001>
module attributes {stable_mosaic.version = 11 : i64} {
  func.func @_mlp_kernel(%arg0: i32, %arg1: memref<8x1024xbf16, #tpu.memory_space<vmem>>, %arg2: memref<8x128xf32, #tpu.memory_space<vmem>>, %arg3: memref<1024x128xbf16, #tpu.memory_space<vmem>>, %arg4: memref<1x128xf32, #tpu.memory_space<vmem>>, %arg5: memref<128x128xbf16, #tpu.memory_space<vmem>>, %arg6: memref<1x128xf32, #tpu.memory_space<vmem>>, %arg7: memref<8x128xf32, #tpu.memory_space<vmem>>) attributes {dimension_semantics = [#tpu.dimension_semantics<parallel>], iteration_bounds = array<i64: 1>, scalar_prefetch = 0 : i64, scratch_operands = 0 : i64, tpu.core_type = #tpu.core_type<tc>, window_params = [{transform_indices = @transform_0, window_bounds = array<i64: 8, 1024>}, {transform_indices = @transform_1, window_bounds = array<i64: 8, 128>}, {pipeline_mode = #tpu.pipeline_mode<synchronous>, transform_indices = @transform_2, window_bounds = array<i64: 1024, 128>}, {pipeline_mode = #tpu.pipeline_mode<synchronous>, transform_indices = @transform_3, window_bounds = array<i64: 1, 128>}, {pipeline_mode = #tpu.pipeline_mode<synchronous>, transform_indices = @transform_4, window_bounds = array<i64: 128, 128>}, {pipeline_mode = #tpu.pipeline_mode<synchronous>, transform_indices = @transform_5, window_bounds = array<i64: 1, 128>}, {transform_indices = @transform_6, window_bounds = array<i64: 8, 128>}]} {
    %c0 = arith.constant 0 : index
    %c0_0 = arith.constant 0 : index
    %0 = vector.load %arg1[%c0, %c0_0] : memref<8x1024xbf16, #tpu.memory_space<vmem>>, vector<8x1024xbf16>
    %c0_1 = arith.constant 0 : index
    %c0_2 = arith.constant 0 : index
    %1 = vector.load %arg3[%c0_1, %c0_2] : memref<1024x128xbf16, #tpu.memory_space<vmem>>, vector<1024x128xbf16>
    %cst = arith.constant dense<0.000000e+00> : vector<8x128xf32>
    %2 = tpu.matmul %0, %1, %cst {dimension_numbers = #tpu.dot_dimension_numbers<[1], [0], [0], [1], [0, 0, 1, 1], [], []>} : vector<8x1024xbf16>, vector<1024x128xbf16>, vector<8x128xf32> -> vector<8x128xf32>
    %c0_3 = arith.constant 0 : index
    %c0_4 = arith.constant 0 : index
    %3 = vector.load %arg4[%c0_3, %c0_4] : memref<1x128xf32, #tpu.memory_space<vmem>>, vector<1x128xf32>
    %4 = vector.broadcast %3 : vector<1x128xf32> to vector<8x128xf32>
    %5 = arith.addf %2, %4 : vector<8x128xf32>
    %c0_5 = arith.constant 0 : index
    %c0_6 = arith.constant 0 : index
    %6 = vector.load %arg2[%c0_5, %c0_6] : memref<8x128xf32, #tpu.memory_space<vmem>>, vector<8x128xf32>
    %7 = arith.mulf %5, %6 : vector<8x128xf32>
    %cst_7 = arith.constant 0.000000e+00 : f32
    %8 = vector.broadcast %cst_7 : f32 to vector<8x128xf32>
    %9 = arith.maximumf %7, %8 : vector<8x128xf32>
    %10 = arith.truncf %9 : vector<8x128xf32> to vector<8x128xbf16>
    %c0_8 = arith.constant 0 : index
    %c0_9 = arith.constant 0 : index
    %11 = vector.load %arg5[%c0_8, %c0_9] : memref<128x128xbf16, #tpu.memory_space<vmem>>, vector<128x128xbf16>
    %cst_10 = arith.constant dense<0.000000e+00> : vector<8x128xf32>
    %12 = tpu.matmul %10, %11, %cst_10 {dimension_numbers = #tpu.dot_dimension_numbers<[1], [0], [0], [1], [0, 0, 1, 1], [], []>} : vector<8x128xbf16>, vector<128x128xbf16>, vector<8x128xf32> -> vector<8x128xf32>
    %c0_11 = arith.constant 0 : index
    %c0_12 = arith.constant 0 : index
    %13 = vector.load %arg6[%c0_11, %c0_12] : memref<1x128xf32, #tpu.memory_space<vmem>>, vector<1x128xf32>
    %14 = vector.broadcast %13 : vector<1x128xf32> to vector<8x128xf32>
    %15 = arith.addf %12, %14 : vector<8x128xf32>
    %cst_13 = arith.constant dense<0xFF800000> : vector<8xf32>
    %16 = vector.multi_reduction <maximumf>, %15, %cst_13 [1] : vector<8x128xf32> to vector<8xf32>
    %17 = vector.shape_cast %16 : vector<8xf32> to vector<8x1xf32>
    %18 = vector.broadcast %17 : vector<8x1xf32> to vector<8x128xf32>
    %19 = arith.subf %15, %18 : vector<8x128xf32>
    %20 = math.exp %19 : vector<8x128xf32>
    %cst_14 = arith.constant dense<0.000000e+00> : vector<8xf32>
    %21 = vector.multi_reduction <add>, %20, %cst_14 [1] : vector<8x128xf32> to vector<8xf32>
    %22 = vector.shape_cast %21 : vector<8xf32> to vector<8x1xf32>
    %23 = vector.broadcast %22 : vector<8x1xf32> to vector<8x128xf32>
    %24 = arith.divf %20, %23 : vector<8x128xf32>
    %c0_15 = arith.constant 0 : index
    %c0_16 = arith.constant 0 : index
    %25 = vector.load %arg7[%c0_15, %c0_16] : memref<8x128xf32, #tpu.memory_space<vmem>>, vector<8x128xf32>
    tpu.vector_store %arg7[%c0_15, %c0_16], %24 {strides = array<i32>} : memref<8x128xf32, #tpu.memory_space<vmem>>, vector<8x128xf32>,
    return
  }
  func.func @transform_0(%arg0: i32) -> (i32, i32) {
    %c0_i32 = arith.constant 0 : i32
    %c0_i32_0 = arith.constant 0 : i32
    return %arg0, %c0_i32 : i32, i32
  }
  func.func @transform_1(%arg0: i32) -> (i32, i32) {
    %c0_i32 = arith.constant 0 : i32
    %c0_i32_0 = arith.constant 0 : i32
    return %arg0, %c0_i32 : i32, i32
  }
  func.func @transform_2(%arg0: i32) -> (i32, i32) {
    %c0_i32 = arith.constant 0 : i32
    %c0_i32_0 = arith.constant 0 : i32
    %c0_i32_1 = arith.constant 0 : i32
    return %c0_i32, %c0_i32_0 : i32, i32
  }
  func.func @transform_3(%arg0: i32) -> (i32, i32) {
    %c0_i32 = arith.constant 0 : i32
    %c0_i32_0 = arith.constant 0 : i32
    %c0_i32_1 = arith.constant 0 : i32
    return %c0_i32, %c0_i32_0 : i32, i32
  }
  func.func @transform_4(%arg0: i32) -> (i32, i32) {
    %c0_i32 = arith.constant 0 : i32
    %c0_i32_0 = arith.constant 0 : i32
    %c0_i32_1 = arith.constant 0 : i32
    return %c0_i32, %c0_i32_0 : i32, i32
  }
  func.func @transform_5(%arg0: i32) -> (i32, i32) {
    %c0_i32 = arith.constant 0 : i32
    %c0_i32_0 = arith.constant 0 : i32
    %c0_i32_1 = arith.constant 0 : i32
    return %c0_i32, %c0_i32_0 : i32, i32
  }
  func.func @transform_6(%arg0: i32) -> (i32, i32) {
    %c0_i32 = arith.constant 0 : i32
    %c0_i32_0 = arith.constant 0 : i32
    return %arg0, %c0_i32 : i32, i32
  }
}

</mosaic_0001>

<llo_original>
// kernel: mlp_forward.1
$region0: #{mlp_forward.1}
  #allocation0 [shape = 'u32[]', space=smem, size = 0x4, offset = 0x4, fixed_abs, tag = 'smem constant byte address 0x4 - core index']
  #allocation1 [shape = 'u32[144,128]{1,0:T(1,128)}', space=vmem, size = 0x12000, scoped, tag = 'internal scratch']
  %s0 = inlined_call_operand.vmem [shape: bf16[8,1024], index: 0, kind: input, shape index: {}]
  %s1 = inlined_call_operand.vmem [shape: f32[8,128], index: 1, kind: input, shape index: {}]
  %s2 = inlined_call_operand.vmem [shape: bf16[1024,128], index: 2, kind: input, shape index: {}]
  %s3 = inlined_call_operand.vmem [shape: f32[1,128], index: 3, kind: input, shape index: {}]
  %s4 = inlined_call_operand.vmem [shape: bf16[128,128], index: 4, kind: input, shape index: {}]
  %s5 = inlined_call_operand.vmem [shape: f32[1,128], index: 5, kind: input, shape index: {}]
  %s6 = inlined_call_operand.vmem [shape: f32[8,128], index: 6, kind: output, shape index: {}]
  %s7 = sld [smem:[#allocation0]]
  $region34: #{mlp_forward.1} parent=0
    _
  %s9 = ssub.s32 1, %s7
  %s10 = scalar_select 0, %s9, %s7
  // Predicated region
  $region2: #{mlp_forward.1} parent=0 // pred_check
    _
  $region3: #{mlp_forward.1} parent=0 // pred_check_branch
    %12 = sbr.rel (0) target = $region5
  $region4: #{mlp_forward.1} parent=0 // pred_region
    _
  $region5: #{mlp_forward.1} parent=0 // pred_fallthru
    _
  // Predicated region
  $region6: #{mlp_forward.1} parent=0 // pred_check
    _
  $region7: #{mlp_forward.1} parent=0 // pred_check_branch
    %14 = sbr.rel (0) target = $region9
  $region8: #{mlp_forward.1} parent=0 // pred_region
    _
  $region9: #{mlp_forward.1} parent=0 // pred_fallthru
    _
  // Predicated region
  $region10: #{mlp_forward.1} parent=0 // pred_check
    _
  $region11: #{mlp_forward.1} parent=0 // pred_check_branch
    %16 = sbr.rel (0) target = $region13
  $region12: #{mlp_forward.1} parent=0 // pred_region
    _
  $region13: #{mlp_forward.1} parent=0 // pred_fallthru
    _
  // Predicated region
  $region14: #{mlp_forward.1} parent=0 // pred_check
    _
  $region15: #{mlp_forward.1} parent=0 // pred_check_branch
    %18 = sbr.rel (0) target = $region17
  $region16: #{mlp_forward.1} parent=0 // pred_region
    _
  $region17: #{mlp_forward.1} parent=0 // pred_fallthru
    _
  // Predicated region
  $region18: #{mlp_forward.1} parent=0 // pred_check
    _
  $region19: #{mlp_forward.1} parent=0 // pred_check_branch
    %20 = sbr.rel (0) target = $region21
  $region20: #{mlp_forward.1} parent=0 // pred_region
    _
  $region21: #{mlp_forward.1} parent=0 // pred_fallthru
    _
  // Predicated region
  $region22: #{mlp_forward.1} parent=0 // pred_check
    _
  $region23: #{mlp_forward.1} parent=0 // pred_check_branch
    %22 = sbr.rel (0) target = $region25
  $region24: #{mlp_forward.1} parent=0 // pred_region
    _
  $region25: #{mlp_forward.1} parent=0 // pred_fallthru
    _
  %v24 = vld [vmem:[%s0] sm:$0xff]
  %v25 = vld [vmem:[%s0 + $0x8] sm:$0xff]
  %v26 = vld [vmem:[%s0 + $0x10] sm:$0xff]
  %v27 = vld [vmem:[%s0 + $0x18] sm:$0xff]
  %v28 = vld [vmem:[%s2] sm:$0xf]
  %v29 = vld [vmem:[%s2 + $0x4] sm:$0xf]
  %v30 = vld [vmem:[%s2 + $0x8] sm:$0xf]
  %v31 = vld [vmem:[%s2 + $0xc] sm:$0xf]
  %v32 = vld [vmem:[%s2 + $0x10] sm:$0xf]
  %v33 = vld [vmem:[%s2 + $0x14] sm:$0xf]
  %v34 = vld [vmem:[%s2 + $0x18] sm:$0xf]
  %v35 = vld [vmem:[%s2 + $0x1c] sm:$0xf]
  %v36 = vld [vmem:[%s2 + $0x20] sm:$0xf]
  %v37 = vld [vmem:[%s2 + $0x24] sm:$0xf]
  %v38 = vld [vmem:[%s2 + $0x28] sm:$0xf]
  %v39 = vld [vmem:[%s2 + $0x2c] sm:$0xf]
  %v40 = vld [vmem:[%s2 + $0x30] sm:$0xf]
  %v41 = vld [vmem:[%s2 + $0x34] sm:$0xf]
  %v42 = vld [vmem:[%s2 + $0x38] sm:$0xf]
  %v43 = vld [vmem:[%s2 + $0x3c] sm:$0xf]
  %v44 = vld [vmem:[%s2 + $0x40] sm:$0xf]
  %v45 = vld [vmem:[%s2 + $0x44] sm:$0xf]
  %v46 = vld [vmem:[%s2 + $0x48] sm:$0xf]
  %v47 = vld [vmem:[%s2 + $0x4c] sm:$0xf]
  %v48 = vld [vmem:[%s2 + $0x50] sm:$0xf]
  %v49 = vld [vmem:[%s2 + $0x54] sm:$0xf]
  %v50 = vld [vmem:[%s2 + $0x58] sm:$0xf]
  %v51 = vld [vmem:[%s2 + $0x5c] sm:$0xf]
  %v52 = vld [vmem:[%s2 + $0x60] sm:$0xf]
  %v53 = vld [vmem:[%s2 + $0x64] sm:$0xf]
  %v54 = vld [vmem:[%s2 + $0x68] sm:$0xf]
  %v55 = vld [vmem:[%s2 + $0x6c] sm:$0xf]
  %v56 = vld [vmem:[%s2 + $0x70] sm:$0xf]
  %v57 = vld [vmem:[%s2 + $0x74] sm:$0xf]
  %v58 = vld [vmem:[%s2 + $0x78] sm:$0xf]
  %v59 = vld [vmem:[%s2 + $0x7c] sm:$0xf]
  %v60 = vld [vmem:[%s2 + $0x80] sm:$0xf]
  %v61 = vld [vmem:[%s2 + $0x84] sm:$0xf]
  %v62 = vld [vmem:[%s2 + $0x88] sm:$0xf]
  %v63 = vld [vmem:[%s2 + $0x8c] sm:$0xf]
  %v64 = vld [vmem:[%s2 + $0x90] sm:$0xf]
  %v65 = vld [vmem:[%s2 + $0x94] sm:$0xf]
  %v66 = vld [vmem:[%s2 + $0x98] sm:$0xf]
  %v67 = vld [vmem:[%s2 + $0x9c] sm:$0xf]
  %v68 = vld [vmem:[%s2 + $0xa0] sm:$0xf]
  %v69 = vld [vmem:[%s2 + $0xa4] sm:$0xf]
  %v70 = vld [vmem:[%s2 + $0xa8] sm:$0xf]
  %v71 = vld [vmem:[%s2 + $0xac] sm:$0xf]
  %v72 = vld [vmem:[%s2 + $0xb0] sm:$0xf]
  %v73 = vld [vmem:[%s2 + $0xb4] sm:$0xf]
  %v74 = vld [vmem:[%s2 + $0xb8] sm:$0xf]
  %v75 = vld [vmem:[%s2 + $0xbc] sm:$0xf]
  %v76 = vld [vmem:[%s2 + $0xc0] sm:$0xf]
  %v77 = vld [vmem:[%s2 + $0xc4] sm:$0xf]
  %v78 = vld [vmem:[%s2 + $0xc8] sm:$0xf]
  %v79 = vld [vmem:[%s2 + $0xcc] sm:$0xf]
  %v80 = vld [vmem:[%s2 + $0xd0] sm:$0xf]
  %v81 = vld [vmem:[%s2 + $0xd4] sm:$0xf]
  %v82 = vld [vmem:[%s2 + $0xd8] sm:$0xf]
  %v83 = vld [vmem:[%s2 + $0xdc] sm:$0xf]
  %v84 = vld [vmem:[%s2 + $0xe0] sm:$0xf]
  %v85 = vld [vmem:[%s2 + $0xe4] sm:$0xf]
  %v86 = vld [vmem:[%s2 + $0xe8] sm:$0xf]
  %v87 = vld [vmem:[%s2 + $0xec] sm:$0xf]
  %v88 = vld [vmem:[%s2 + $0xf0] sm:$0xf]
  %v89 = vld [vmem:[%s2 + $0xf4] sm:$0xf]
  %v90 = vld [vmem:[%s2 + $0xf8] sm:$0xf]
  %v91 = vld [vmem:[%s2 + $0xfc] sm:$0xf]
  %v92 = vld [vmem:[%s2 + $0x100] sm:$0xf]
  %v93 = vld [vmem:[%s2 + $0x104] sm:$0xf]
  %v94 = vld [vmem:[%s2 + $0x108] sm:$0xf]
  %v95 = vld [vmem:[%s2 + $0x10c] sm:$0xf]
  %v96 = vld [vmem:[%s2 + $0x110] sm:$0xf]
  %v97 = vld [vmem:[%s2 + $0x114] sm:$0xf]
  %v98 = vld [vmem:[%s2 + $0x118] sm:$0xf]
  %v99 = vld [vmem:[%s2 + $0x11c] sm:$0xf]
  %v100 = vld [vmem:[%s2 + $0x120] sm:$0xf]
  %v101 = vld [vmem:[%s2 + $0x124] sm:$0xf]
  %v102 = vld [vmem:[%s2 + $0x128] sm:$0xf]
  %v103 = vld [vmem:[%s2 + $0x12c] sm:$0xf]
  %v104 = vld [vmem:[%s2 + $0x130] sm:$0xf]
  %v105 = vld [vmem:[%s2 + $0x134] sm:$0xf]
  %v106 = vld [vmem:[%s2 + $0x138] sm:$0xf]
  %v107 = vld [vmem:[%s2 + $0x13c] sm:$0xf]
  %v108 = vld [vmem:[%s2 + $0x140] sm:$0xf]
  %v109 = vld [vmem:[%s2 + $0x144] sm:$0xf]
  %v110 = vld [vmem:[%s2 + $0x148] sm:$0xf]
  %v111 = vld [vmem:[%s2 + $0x14c] sm:$0xf]
  %v112 = vld [vmem:[%s2 + $0x150] sm:$0xf]
  %v113 = vld [vmem:[%s2 + $0x154] sm:$0xf]
  %v114 = vld [vmem:[%s2 + $0x158] sm:$0xf]
  %v115 = vld [vmem:[%s2 + $0x15c] sm:$0xf]
  %v116 = vld [vmem:[%s2 + $0x160] sm:$0xf]
  %v117 = vld [vmem:[%s2 + $0x164] sm:$0xf]
  %v118 = vld [vmem:[%s2 + $0x168] sm:$0xf]
  %v119 = vld [vmem:[%s2 + $0x16c] sm:$0xf]
  %v120 = vld [vmem:[%s2 + $0x170] sm:$0xf]
  %v121 = vld [vmem:[%s2 + $0x174] sm:$0xf]
  %v122 = vld [vmem:[%s2 + $0x178] sm:$0xf]
  %v123 = vld [vmem:[%s2 + $0x17c] sm:$0xf]
  %v124 = vld [vmem:[%s2 + $0x180] sm:$0xf]
  %v125 = vld [vmem:[%s2 + $0x184] sm:$0xf]
  %v126 = vld [vmem:[%s2 + $0x188] sm:$0xf]
  %v127 = vld [vmem:[%s2 + $0x18c] sm:$0xf]
  %v128 = vld [vmem:[%s2 + $0x190] sm:$0xf]
  %v129 = vld [vmem:[%s2 + $0x194] sm:$0xf]
  %v130 = vld [vmem:[%s2 + $0x198] sm:$0xf]
  %v131 = vld [vmem:[%s2 + $0x19c] sm:$0xf]
  %v132 = vld [vmem:[%s2 + $0x1a0] sm:$0xf]
  %v133 = vld [vmem:[%s2 + $0x1a4] sm:$0xf]
  %v134 = vld [vmem:[%s2 + $0x1a8] sm:$0xf]
  %v135 = vld [vmem:[%s2 + $0x1ac] sm:$0xf]
  %v136 = vld [vmem:[%s2 + $0x1b0] sm:$0xf]
  %v137 = vld [vmem:[%s2 + $0x1b4] sm:$0xf]
  %v138 = vld [vmem:[%s2 + $0x1b8] sm:$0xf]
  %v139 = vld [vmem:[%s2 + $0x1bc] sm:$0xf]
  %v140 = vld [vmem:[%s2 + $0x1c0] sm:$0xf]
  %v141 = vld [vmem:[%s2 + $0x1c4] sm:$0xf]
  %v142 = vld [vmem:[%s2 + $0x1c8] sm:$0xf]
  %v143 = vld [vmem:[%s2 + $0x1cc] sm:$0xf]
  %v144 = vld [vmem:[%s2 + $0x1d0] sm:$0xf]
  %v145 = vld [vmem:[%s2 + $0x1d4] sm:$0xf]
  %v146 = vld [vmem:[%s2 + $0x1d8] sm:$0xf]
  %v147 = vld [vmem:[%s2 + $0x1dc] sm:$0xf]
  %v148 = vld [vmem:[%s2 + $0x1e0] sm:$0xf]
  %v149 = vld [vmem:[%s2 + $0x1e4] sm:$0xf]
  %v150 = vld [vmem:[%s2 + $0x1e8] sm:$0xf]
  %v151 = vld [vmem:[%s2 + $0x1ec] sm:$0xf]
  %v152 = vld [vmem:[%s2 + $0x1f0] sm:$0xf]
  %v153 = vld [vmem:[%s2 + $0x1f4] sm:$0xf]
  %v154 = vld [vmem:[%s2 + $0x1f8] sm:$0xf]
  %v155 = vld [vmem:[%s2 + $0x1fc] sm:$0xf]
  %v156 = vld [vmem:[%s3] sm:$0x1]
  %v158 = vlaneseq
  %v159 = vshrl.u32 %v158, 7
  %v160 = vsub.s32 0, %v159
  %v161 = vrot.slane %v156, %v160
  %v167 = vunpack.c.l.b16 %v24
  %v168 = vunpack.c.h.b16 %v24
  %v169 = vunpack.c.l.b16 %v25
  %v170 = vunpack.c.h.b16 %v25
  %v171 = vunpack.c.l.b16 %v26
  %v172 = vunpack.c.h.b16 %v26
  %v173 = vunpack.c.l.b16 %v27
  %v174 = vunpack.c.h.b16 %v27
  %v175 = vpack.c.b16 %v167, %v167
  %v176 = vpack.c.b16 %v168, %v168
  %v177 = vpack.c.b16 %v169, %v169
  %v178 = vpack.c.b16 %v170, %v170
  %v179 = vpack.c.b16 %v171, %v171
  %v180 = vpack.c.b16 %v172, %v172
  %v181 = vpack.c.b16 %v173, %v173
  %v182 = vpack.c.b16 %v174, %v174
  %v319 = vunpack.c.l.b16 %v28
  %v320 = vunpack.c.l.b16 %v29
  %v321 = vunpack.c.l.b16 %v30
  %v322 = vunpack.c.l.b16 %v31
  %v323 = vunpack.c.l.b16 %v32
  %v324 = vunpack.c.l.b16 %v33
  %v325 = vunpack.c.l.b16 %v34
  %v326 = vunpack.c.l.b16 %v35
  %v327 = vunpack.c.l.b16 %v36
  %v328 = vunpack.c.l.b16 %v37
  %v329 = vunpack.c.l.b16 %v38
  %v330 = vunpack.c.l.b16 %v39
  %v331 = vunpack.c.l.b16 %v40
  %v332 = vunpack.c.l.b16 %v41
  %v333 = vunpack.c.l.b16 %v42
  %v334 = vunpack.c.l.b16 %v43
  %v335 = vunpack.c.l.b16 %v44
  %v336 = vunpack.c.l.b16 %v45
  %v337 = vunpack.c.l.b16 %v46
  %v338 = vunpack.c.l.b16 %v47
  %v339 = vunpack.c.l.b16 %v48
  %v340 = vunpack.c.l.b16 %v49
  %v341 = vunpack.c.l.b16 %v50
  %v342 = vunpack.c.l.b16 %v51
  %v343 = vunpack.c.l.b16 %v52
  %v344 = vunpack.c.l.b16 %v53
  %v345 = vunpack.c.l.b16 %v54
  %v346 = vunpack.c.l.b16 %v55
  %v347 = vunpack.c.l.b16 %v56
  %v348 = vunpack.c.l.b16 %v57
  %v349 = vunpack.c.l.b16 %v58
  %v350 = vunpack.c.l.b16 %v59
  %v351 = vunpack.c.l.b16 %v60
  %v352 = vunpack.c.l.b16 %v61
  %v353 = vunpack.c.l.b16 %v62
  %v354 = vunpack.c.l.b16 %v63
  %v355 = vunpack.c.l.b16 %v64
  %v356 = vunpack.c.l.b16 %v65
  %v357 = vunpack.c.l.b16 %v66
  %v358 = vunpack.c.l.b16 %v67
  %v359 = vunpack.c.l.b16 %v68
  %v360 = vunpack.c.l.b16 %v69
  %v361 = vunpack.c.l.b16 %v70
  %v362 = vunpack.c.l.b16 %v71
  %v363 = vunpack.c.l.b16 %v72
  %v364 = vunpack.c.l.b16 %v73
  %v365 = vunpack.c.l.b16 %v74
  %v366 = vunpack.c.l.b16 %v75
  %v367 = vunpack.c.l.b16 %v76
  %v368 = vunpack.c.l.b16 %v77
  %v369 = vunpack.c.l.b16 %v78
  %v370 = vunpack.c.l.b16 %v79
  %v371 = vunpack.c.l.b16 %v80
  %v372 = vunpack.c.l.b16 %v81
  %v373 = vunpack.c.l.b16 %v82
  %v374 = vunpack.c.l.b16 %v83
  %v375 = vunpack.c.l.b16 %v84
  %v376 = vunpack.c.l.b16 %v85
  %v377 = vunpack.c.l.b16 %v86
  %v378 = vunpack.c.l.b16 %v87
  %v379 = vunpack.c.l.b16 %v88
  %v380 = vunpack.c.l.b16 %v89
  %v381 = vunpack.c.l.b16 %v90
  %v382 = vunpack.c.l.b16 %v91
  %v383 = vunpack.c.l.b16 %v92
  %v384 = vunpack.c.l.b16 %v93
  %v385 = vunpack.c.l.b16 %v94
  %v386 = vunpack.c.l.b16 %v95
  %v387 = vunpack.c.l.b16 %v96
  %v388 = vunpack.c.l.b16 %v97
  %v389 = vunpack.c.l.b16 %v98
  %v390 = vunpack.c.l.b16 %v99
  %v391 = vunpack.c.l.b16 %v100
  %v392 = vunpack.c.l.b16 %v101
  %v393 = vunpack.c.l.b16 %v102
  %v394 = vunpack.c.l.b16 %v103
  %v395 = vunpack.c.l.b16 %v104
  %v396 = vunpack.c.l.b16 %v105
  %v397 = vunpack.c.l.b16 %v106
  %v398 = vunpack.c.l.b16 %v107
  %v399 = vunpack.c.l.b16 %v108
  %v400 = vunpack.c.l.b16 %v109
  %v401 = vunpack.c.l.b16 %v110
  %v402 = vunpack.c.l.b16 %v111
  %v403 = vunpack.c.l.b16 %v112
  %v404 = vunpack.c.l.b16 %v113
  %v405 = vunpack.c.l.b16 %v114
  %v406 = vunpack.c.l.b16 %v115
  %v407 = vunpack.c.l.b16 %v116
  %v408 = vunpack.c.l.b16 %v117
  %v409 = vunpack.c.l.b16 %v118
  %v410 = vunpack.c.l.b16 %v119
  %v411 = vunpack.c.l.b16 %v120
  %v412 = vunpack.c.l.b16 %v121
  %v413 = vunpack.c.l.b16 %v122
  %v414 = vunpack.c.l.b16 %v123
  %v415 = vunpack.c.l.b16 %v124
  %v416 = vunpack.c.l.b16 %v125
  %v417 = vunpack.c.l.b16 %v126
  %v418 = vunpack.c.l.b16 %v127
  %v419 = vunpack.c.l.b16 %v128
  %v420 = vunpack.c.l.b16 %v129
  %v421 = vunpack.c.l.b16 %v130
  %v422 = vunpack.c.l.b16 %v131
  %v423 = vunpack.c.l.b16 %v132
  %v424 = vunpack.c.l.b16 %v133
  %v425 = vunpack.c.l.b16 %v134
  %v426 = vunpack.c.l.b16 %v135
  %v427 = vunpack.c.l.b16 %v136
  %v428 = vunpack.c.l.b16 %v137
  %v429 = vunpack.c.l.b16 %v138
  %v430 = vunpack.c.l.b16 %v139
  %v431 = vunpack.c.l.b16 %v140
  %v432 = vunpack.c.l.b16 %v141
  %v433 = vunpack.c.l.b16 %v142
  %v434 = vunpack.c.l.b16 %v143
  %v435 = vunpack.c.l.b16 %v144
  %v436 = vunpack.c.l.b16 %v145
  %v437 = vunpack.c.l.b16 %v146
  %v438 = vunpack.c.l.b16 %v147
  %v439 = vunpack.c.l.b16 %v148
  %v440 = vunpack.c.l.b16 %v149
  %v441 = vunpack.c.l.b16 %v150
  %v442 = vunpack.c.l.b16 %v151
  %v443 = vunpack.c.l.b16 %v152
  %v444 = vunpack.c.l.b16 %v153
  %v445 = vunpack.c.l.b16 %v154
  %v446 = vunpack.c.l.b16 %v155
  %v447 = vpack.c.b16 %v320, %v319
  %v448 = vpack.c.b16 %v322, %v321
  %v449 = vpack.c.b16 %v324, %v323
  %v450 = vpack.c.b16 %v326, %v325
  %v451 = vpack.c.b16 %v328, %v327
  %v452 = vpack.c.b16 %v330, %v329
  %v453 = vpack.c.b16 %v332, %v331
  %v454 = vpack.c.b16 %v334, %v333
  %v455 = vpack.c.b16 %v336, %v335
  %v456 = vpack.c.b16 %v338, %v337
  %v457 = vpack.c.b16 %v340, %v339
  %v458 = vpack.c.b16 %v342, %v341
  %v459 = vpack.c.b16 %v344, %v343
  %v460 = vpack.c.b16 %v346, %v345
  %v461 = vpack.c.b16 %v348, %v347
  %v462 = vpack.c.b16 %v350, %v349
  %v463 = vpack.c.b16 %v352, %v351
  %v464 = vpack.c.b16 %v354, %v353
  %v465 = vpack.c.b16 %v356, %v355
  %v466 = vpack.c.b16 %v358, %v357
  %v467 = vpack.c.b16 %v360, %v359
  %v468 = vpack.c.b16 %v362, %v361
  %v469 = vpack.c.b16 %v364, %v363
  %v470 = vpack.c.b16 %v366, %v365
  %v471 = vpack.c.b16 %v368, %v367
  %v472 = vpack.c.b16 %v370, %v369
  %v473 = vpack.c.b16 %v372, %v371
  %v474 = vpack.c.b16 %v374, %v373
  %v475 = vpack.c.b16 %v376, %v375
  %v476 = vpack.c.b16 %v378, %v377
  %v477 = vpack.c.b16 %v380, %v379
  %v478 = vpack.c.b16 %v382, %v381
  %v479 = vpack.c.b16 %v384, %v383
  %v480 = vpack.c.b16 %v386, %v385
  %v481 = vpack.c.b16 %v388, %v387
  %v482 = vpack.c.b16 %v390, %v389
  %v483 = vpack.c.b16 %v392, %v391
  %v484 = vpack.c.b16 %v394, %v393
  %v485 = vpack.c.b16 %v396, %v395
  %v486 = vpack.c.b16 %v398, %v397
  %v487 = vpack.c.b16 %v400, %v399
  %v488 = vpack.c.b16 %v402, %v401
  %v489 = vpack.c.b16 %v404, %v403
  %v490 = vpack.c.b16 %v406, %v405
  %v491 = vpack.c.b16 %v408, %v407
  %v492 = vpack.c.b16 %v410, %v409
  %v493 = vpack.c.b16 %v412, %v411
  %v494 = vpack.c.b16 %v414, %v413
  %v495 = vpack.c.b16 %v416, %v415
  %v496 = vpack.c.b16 %v418, %v417
  %v497 = vpack.c.b16 %v420, %v419
  %v498 = vpack.c.b16 %v422, %v421
  %v499 = vpack.c.b16 %v424, %v423
  %v500 = vpack.c.b16 %v426, %v425
  %v501 = vpack.c.b16 %v428, %v427
  %v502 = vpack.c.b16 %v430, %v429
  %v503 = vpack.c.b16 %v432, %v431
  %v504 = vpack.c.b16 %v434, %v433
  %v505 = vpack.c.b16 %v436, %v435
  %v506 = vpack.c.b16 %v438, %v437
  %v507 = vpack.c.b16 %v440, %v439
  %v508 = vpack.c.b16 %v442, %v441
  %v509 = vpack.c.b16 %v444, %v443
  %v510 = vpack.c.b16 %v446, %v445
  %575 = vmatprep.subr.bf16.mxu0 0
  %576 = vmatpush1.bf16.msra.mxu0 %v447
  %577 = vmatprep.subr.bf16.mxu0 0
  %578 = vmatpush1.bf16.msra.mxu0 %v448
  %579 = vmatprep.subr.bf16.mxu0 0
  %580 = vmatpush1.bf16.msra.mxu0 %v449
  %581 = vmatprep.subr.bf16.mxu0 0
  %582 = vmatpush1.bf16.msra.mxu0 %v450
  %583 = vmatprep.subr.bf16.mxu0 0
  %584 = vmatpush1.bf16.msra.mxu0 %v451
  %585 = vmatprep.subr.bf16.mxu0 0
  %586 = vmatpush1.bf16.msra.mxu0 %v452
  %587 = vmatprep.subr.bf16.mxu0 0
  %588 = vmatpush1.bf16.msra.mxu0 %v453
  %589 = vmatprep.subr.bf16.mxu0 0
  %590 = vmatpush1.bf16.msra.mxu0 %v454
  %591 = vmatprep.subr.bf16.mxu0 0
  %592 = vmatpush1.bf16.msra.mxu0 %v455
  %593 = vmatprep.subr.bf16.mxu0 0
  %594 = vmatpush1.bf16.msra.mxu0 %v456
  %595 = vmatprep.subr.bf16.mxu0 0
  %596 = vmatpush1.bf16.msra.mxu0 %v457
  %597 = vmatprep.subr.bf16.mxu0 0
  %598 = vmatpush1.bf16.msra.mxu0 %v458
  %599 = vmatprep.subr.bf16.mxu0 0
  %600 = vmatpush1.bf16.msra.mxu0 %v459
  %601 = vmatprep.subr.bf16.mxu0 0
  %602 = vmatpush1.bf16.msra.mxu0 %v460
  %603 = vmatprep.subr.bf16.mxu0 0
  %604 = vmatpush1.bf16.msra.mxu0 %v461
  %605 = vmatprep.subr.bf16.mxu0 0
  %606 = vmatpush1.bf16.msra.mxu0 %v462
  %607 = vmatprep.mubr.bf16.mxu0 %v176
  %608 = vmatmul.mubr.bf16.gmra.mrb[0].mxu0 %v175
  %v609 = vpop.f32.mrb[0].mxu0
  %v610 = vadd.f32 %v161, %v609
  %v611 = vpop.f32.mrb[0].mxu0
  %v612 = vpop.f32.mrb[0].mxu0
  %v613 = vpop.f32.mrb[0].mxu0
  %614 = vdwg.mxu0
  %615 = vmatprep.subr.bf16.mxu0 0
  %616 = vmatpush1.bf16.msra.mxu0 %v463
  %617 = vmatprep.subr.bf16.mxu0 0
  %618 = vmatpush1.bf16.msra.mxu0 %v464
  %619 = vmatprep.subr.bf16.mxu0 0
  %620 = vmatpush1.bf16.msra.mxu0 %v465
  %621 = vmatprep.subr.bf16.mxu0 0
  %622 = vmatpush1.bf16.msra.mxu0 %v466
  %623 = vmatprep.subr.bf16.mxu0 0
  %624 = vmatpush1.bf16.msra.mxu0 %v467
  %625 = vmatprep.subr.bf16.mxu0 0
  %626 = vmatpush1.bf16.msra.mxu0 %v468
  %627 = vmatprep.subr.bf16.mxu0 0
  %628 = vmatpush1.bf16.msra.mxu0 %v469
  %629 = vmatprep.subr.bf16.mxu0 0
  %630 = vmatpush1.bf16.msra.mxu0 %v470
  %631 = vmatprep.subr.bf16.mxu0 0
  %632 = vmatpush1.bf16.msra.mxu0 %v471
  %633 = vmatprep.subr.bf16.mxu0 0
  %634 = vmatpush1.bf16.msra.mxu0 %v472
  %635 = vmatprep.subr.bf16.mxu0 0
  %636 = vmatpush1.bf16.msra.mxu0 %v473
  %637 = vmatprep.subr.bf16.mxu0 0
  %638 = vmatpush1.bf16.msra.mxu0 %v474
  %639 = vmatprep.subr.bf16.mxu0 0
  %640 = vmatpush1.bf16.msra.mxu0 %v475
  %641 = vmatprep.subr.bf16.mxu0 0
  %642 = vmatpush1.bf16.msra.mxu0 %v476
  %643 = vmatprep.subr.bf16.mxu0 0
  %644 = vmatpush1.bf16.msra.mxu0 %v477
  %645 = vmatprep.subr.bf16.mxu0 0
  %646 = vmatpush1.bf16.msra.mxu0 %v478
  %647 = vmatprep.mubr.bf16.mxu0 %v178
  %648 = vmatmul.mubr.bf16.gmra.mrb[0].mxu0 %v177
  %v649 = vpop.f32.mrb[0].mxu0
  %v650 = vadd.f32 %v610, %v649
  %v651 = vpop.f32.mrb[0].mxu0
  %v652 = vpop.f32.mrb[0].mxu0
  %v653 = vpop.f32.mrb[0].mxu0
  %654 = vdwg.mxu0
  %655 = vmatprep.subr.bf16.mxu0 0
  %656 = vmatpush1.bf16.msra.mxu0 %v479
  %657 = vmatprep.subr.bf16.mxu0 0
  %658 = vmatpush1.bf16.msra.mxu0 %v480
  %659 = vmatprep.subr.bf16.mxu0 0
  %660 = vmatpush1.bf16.msra.mxu0 %v481
  %661 = vmatprep.subr.bf16.mxu0 0
  %662 = vmatpush1.bf16.msra.mxu0 %v482
  %663 = vmatprep.subr.bf16.mxu0 0
  %664 = vmatpush1.bf16.msra.mxu0 %v483
  %665 = vmatprep.subr.bf16.mxu0 0
  %666 = vmatpush1.bf16.msra.mxu0 %v484
  %667 = vmatprep.subr.bf16.mxu0 0
  %668 = vmatpush1.bf16.msra.mxu0 %v485
  %669 = vmatprep.subr.bf16.mxu0 0
  %670 = vmatpush1.bf16.msra.mxu0 %v486
  %671 = vmatprep.subr.bf16.mxu0 0
  %672 = vmatpush1.bf16.msra.mxu0 %v487
  %673 = vmatprep.subr.bf16.mxu0 0
  %674 = vmatpush1.bf16.msra.mxu0 %v488
  %675 = vmatprep.subr.bf16.mxu0 0
  %676 = vmatpush1.bf16.msra.mxu0 %v489
  %677 = vmatprep.subr.bf16.mxu0 0
  %678 = vmatpush1.bf16.msra.mxu0 %v490
  %679 = vmatprep.subr.bf16.mxu0 0
  %680 = vmatpush1.bf16.msra.mxu0 %v491
  %681 = vmatprep.subr.bf16.mxu0 0
  %682 = vmatpush1.bf16.msra.mxu0 %v492
  %683 = vmatprep.subr.bf16.mxu0 0
  %684 = vmatpush1.bf16.msra.mxu0 %v493
  %685 = vmatprep.subr.bf16.mxu0 0
  %686 = vmatpush1.bf16.msra.mxu0 %v494
  %687 = vmatprep.mubr.bf16.mxu0 %v180
  %688 = vmatmul.mubr.bf16.gmra.mrb[0].mxu0 %v179
  %v689 = vpop.f32.mrb[0].mxu0
  %v690 = vadd.f32 %v650, %v689
  %v691 = vpop.f32.mrb[0].mxu0
  %v692 = vpop.f32.mrb[0].mxu0
  %v693 = vpop.f32.mrb[0].mxu0
  %694 = vdwg.mxu0
  %695 = vmatprep.subr.bf16.mxu0 0
  %696 = vmatpush1.bf16.msra.mxu0 %v495
  %697 = vmatprep.subr.bf16.mxu0 0
  %698 = vmatpush1.bf16.msra.mxu0 %v496
  %699 = vmatprep.subr.bf16.mxu0 0
  %700 = vmatpush1.bf16.msra.mxu0 %v497
  %701 = vmatprep.subr.bf16.mxu0 0
  %702 = vmatpush1.bf16.msra.mxu0 %v498
  %703 = vmatprep.subr.bf16.mxu0 0
  %704 = vmatpush1.bf16.msra.mxu0 %v499
  %705 = vmatprep.subr.bf16.mxu0 0
  %706 = vmatpush1.bf16.msra.mxu0 %v500
  %707 = vmatprep.subr.bf16.mxu0 0
  %708 = vmatpush1.bf16.msra.mxu0 %v501
  %709 = vmatprep.subr.bf16.mxu0 0
  %710 = vmatpush1.bf16.msra.mxu0 %v502
  %711 = vmatprep.subr.bf16.mxu0 0
  %712 = vmatpush1.bf16.msra.mxu0 %v503
  %713 = vmatprep.subr.bf16.mxu0 0
  %714 = vmatpush1.bf16.msra.mxu0 %v504
  %715 = vmatprep.subr.bf16.mxu0 0
  %716 = vmatpush1.bf16.msra.mxu0 %v505
  %717 = vmatprep.subr.bf16.mxu0 0
  %718 = vmatpush1.bf16.msra.mxu0 %v506
  %719 = vmatprep.subr.bf16.mxu0 0
  %720 = vmatpush1.bf16.msra.mxu0 %v507
  %721 = vmatprep.subr.bf16.mxu0 0
  %722 = vmatpush1.bf16.msra.mxu0 %v508
  %723 = vmatprep.subr.bf16.mxu0 0
  %724 = vmatpush1.bf16.msra.mxu0 %v509
  %725 = vmatprep.subr.bf16.mxu0 0
  %726 = vmatpush1.bf16.msra.mxu0 %v510
  %727 = vmatprep.mubr.bf16.mxu0 %v182
  %728 = vmatmul.mubr.bf16.gmra.mrb[0].mxu0 %v181
  %v729 = vpop.f32.mrb[0].mxu0
  %v730 = vadd.f32 %v690, %v729
  %v731 = vpop.f32.mrb[0].mxu0
  %v732 = vpop.f32.mrb[0].mxu0
  %v733 = vpop.f32.mrb[0].mxu0
  %734 = vdwg.mxu0
  %v735 = vld [vmem:[%s1] sm:$0xff]
  %v736 = vmul.f32 %v730, %v735
  %v737 = vmax.f32 %v736, 0.0
  %v738 = vpack.c.bf16 %v737, %v737
  %v739 = vld [vmem:[%s4] sm:$0xf]
  %v740 = vld [vmem:[%s4 + $0x4] sm:$0xf]
  %v741 = vld [vmem:[%s4 + $0x8] sm:$0xf]
  %v742 = vld [vmem:[%s4 + $0xc] sm:$0xf]
  %v743 = vld [vmem:[%s4 + $0x10] sm:$0xf]
  %v744 = vld [vmem:[%s4 + $0x14] sm:$0xf]
  %v745 = vld [vmem:[%s4 + $0x18] sm:$0xf]
  %v746 = vld [vmem:[%s4 + $0x1c] sm:$0xf]
  %v747 = vld [vmem:[%s4 + $0x20] sm:$0xf]
  %v748 = vld [vmem:[%s4 + $0x24] sm:$0xf]
  %v749 = vld [vmem:[%s4 + $0x28] sm:$0xf]
  %v750 = vld [vmem:[%s4 + $0x2c] sm:$0xf]
  %v751 = vld [vmem:[%s4 + $0x30] sm:$0xf]
  %v752 = vld [vmem:[%s4 + $0x34] sm:$0xf]
  %v753 = vld [vmem:[%s4 + $0x38] sm:$0xf]
  %v754 = vld [vmem:[%s4 + $0x3c] sm:$0xf]
  %v755 = vld [vmem:[%s5] sm:$0x1]
  %v757 = vlaneseq
  %v758 = vshrl.u32 %v757, 7
  %v759 = vsub.s32 0, %v758
  %v760 = vrot.slane %v755, %v759
  %v778 = vunpack.c.l.b16 %v739
  %v779 = vunpack.c.l.b16 %v740
  %v780 = vunpack.c.l.b16 %v741
  %v781 = vunpack.c.l.b16 %v742
  %v782 = vunpack.c.l.b16 %v743
  %v783 = vunpack.c.l.b16 %v744
  %v784 = vunpack.c.l.b16 %v745
  %v785 = vunpack.c.l.b16 %v746
  %v786 = vunpack.c.l.b16 %v747
  %v787 = vunpack.c.l.b16 %v748
  %v788 = vunpack.c.l.b16 %v749
  %v789 = vunpack.c.l.b16 %v750
  %v790 = vunpack.c.l.b16 %v751
  %v791 = vunpack.c.l.b16 %v752
  %v792 = vunpack.c.l.b16 %v753
  %v793 = vunpack.c.l.b16 %v754
  %v794 = vpack.c.b16 %v779, %v778
  %v795 = vpack.c.b16 %v781, %v780
  %v796 = vpack.c.b16 %v783, %v782
  %v797 = vpack.c.b16 %v785, %v784
  %v798 = vpack.c.b16 %v787, %v786
  %v799 = vpack.c.b16 %v789, %v788
  %v800 = vpack.c.b16 %v791, %v790
  %v801 = vpack.c.b16 %v793, %v792
  %810 = vmatprep.subr.bf16.mxu0 0
  %811 = vmatpush1.bf16.msra.mxu0 %v794
  %812 = vmatprep.subr.bf16.mxu0 0
  %813 = vmatpush1.bf16.msra.mxu0 %v795
  %814 = vmatprep.subr.bf16.mxu0 0
  %815 = vmatpush1.bf16.msra.mxu0 %v796
  %816 = vmatprep.subr.bf16.mxu0 0
  %817 = vmatpush1.bf16.msra.mxu0 %v797
  %818 = vmatprep.subr.bf16.mxu0 0
  %819 = vmatpush1.bf16.msra.mxu0 %v798
  %820 = vmatprep.subr.bf16.mxu0 0
  %821 = vmatpush1.bf16.msra.mxu0 %v799
  %822 = vmatprep.subr.bf16.mxu0 0
  %823 = vmatpush1.bf16.msra.mxu0 %v800
  %824 = vmatprep.subr.bf16.mxu0 0
  %825 = vmatpush1.bf16.msra.mxu0 %v801
  %826 = vmatprep.subr.bf16.mxu0 0
  %827 = vmatpush1.bf16.msra.mxu0 0
  %828 = vmatprep.subr.bf16.mxu0 0
  %829 = vmatpush1.bf16.msra.mxu0 0
  %830 = vmatprep.subr.bf16.mxu0 0
  %831 = vmatpush1.bf16.msra.mxu0 0
  %832 = vmatprep.subr.bf16.mxu0 0
  %833 = vmatpush1.bf16.msra.mxu0 0
  %834 = vmatprep.subr.bf16.mxu0 0
  %835 = vmatpush1.bf16.msra.mxu0 0
  %836 = vmatprep.subr.bf16.mxu0 0
  %837 = vmatpush1.bf16.msra.mxu0 0
  %838 = vmatprep.subr.bf16.mxu0 0
  %839 = vmatpush1.bf16.msra.mxu0 0
  %840 = vmatprep.subr.bf16.mxu0 0
  %841 = vmatpush1.bf16.msra.mxu0 0
  %842 = vmatprep.mubr.bf16.mxu0 0
  %843 = vmatmul.mubr.bf16.gmra.mrb[0].mxu0 %v738
  %v844 = vpop.f32.mrb[0].mxu0
  %v845 = vadd.f32 %v760, %v844
  %v846 = vpop.f32.mrb[0].mxu0
  %v847 = vpop.f32.mrb[0].mxu0
  %v848 = vpop.f32.mrb[0].mxu0
  %849 = vdwg.mxu0
  %850 = vmax.xlane.f32.xlu0 %v845
  %v851 = vpop.xlane.xlu0 %850
  %v852 = vsub.f32 %v845, %v851
  %v853 = vmul.f32 %v852, 1.442695
  %v854 = vpow.pop %v853
  %855 = vadd.xlane.f32.xlu0 %v854
  %v856 = vpop.xlane.xlu0 %855
  %v857 = vrcp.pop %v856
  %v858 = vmul.f32 %v854, %v857
  %859 = vst [vmem:[%s6] sm:$0xff] %v858
  // Predicated region
  $region26: #{mlp_forward.1} parent=0 // pred_check
    _
  $region27: #{mlp_forward.1} parent=0 // pred_check_branch
    %861 = sbr.rel (0) target = $region29
  $region28: #{mlp_forward.1} parent=0 // pred_region
    _
  $region29: #{mlp_forward.1} parent=0 // pred_fallthru
    _
  // Predicated region
  $region30: #{mlp_forward.1} parent=0 // pred_check
    _
  $region31: #{mlp_forward.1} parent=0 // pred_check_branch
    %863 = sbr.rel (0) target = $region33
  $region32: #{mlp_forward.1} parent=0 // pred_region
    _
  $region33: #{mlp_forward.1} parent=0 // pred_fallthru
    _

</llo_original>
